<compile_context>
chip_gen: v7x
topology: tpu7x:2x2x1
jax: 0.10.0
libtpu: 0.0.40
codegen_flags: <defaults>
</compile_context>

<pallas_src>
from functools import partial

import jax
import jax.numpy as jnp
import numpy as np
from jax.experimental import pallas as pl
from jax.experimental.pallas import tpu as pltpu


def _dw3x3_s2_kernel(x_ref, xh_ref, w_ref, o_ref):
    """One (batch, output-row-tile) step of the depthwise 3x3 / stride-2 conv.

    x_ref  : (2*TH, W+1, C) padded input rows [2*i*TH, 2*i*TH + 2*TH), channels-last
    xh_ref : (1,    W+1, C) halo: padded input row 2*(i+1)*TH
    w_ref  : (9, C)         depthwise taps, row k = w[kh, kw, :] with k = 3*kh + kw
    o_ref  : (TH, OW, C)    output rows [i*TH, (i+1)*TH)
    """
    TH, OW, C = o_ref.shape

    # Hoist the nine tap vectors once per step (JAX does not CSE broadcast_in_dim).
    w = w_ref[...]
    w00, w01, w02 = w[0], w[1], w[2]
    w10, w11, w12 = w[3], w[4], w[5]
    w20, w21, w22 = w[6], w[7], w[8]

    # Stride-2 column phases read straight from the VMEM tile (sublane-strided
    # loads): no wrapper-materialized even/odd planes, no value-level column
    # shifts/rolls for the +1-column (kw=2) taps.  Each is (2*TH, OW, C).
    a0 = x_ref[:, pl.ds(0, OW, 2), :]     # cols 0, 2, ..., W-2   -> kw = 0 taps
    b1 = x_ref[:, pl.ds(1, OW, 2), :]     # cols 1, 3, ..., W-1   -> kw = 1 taps
    a2 = x_ref[:, pl.ds(2, OW, 2), :]     # cols 2, 4, ..., W     -> kw = 2 taps

    # Split even/odd input rows with leading-dim reshapes / indexing only
    # (no sublane/lane data movement).
    a0 = a0.reshape(TH, 2, OW, C)
    b1 = b1.reshape(TH, 2, OW, C)
    a2 = a2.reshape(TH, 2, OW, C)
    a0_r0, a0_r1 = a0[:, 0], a0[:, 1]     # padded rows 2*oh and 2*oh + 1
    b1_r0, b1_r1 = b1[:, 0], b1[:, 1]
    a2_r0, a2_r1 = a2[:, 0], a2[:, 1]

    # kh = 0 and kh = 1 contributions for all TH output rows (tree-summed).
    p01 = ((a0_r0 * w00 + b1_r0 * w01 + a2_r0 * w02)
           + (a0_r1 * w10 + b1_r1 * w11 + a2_r1 * w12))

    # kh = 2 (padded row 2*oh + 2).  For output rows [0, TH-1) that is the even-row
    # phase shifted down one output row; for the last row it is the halo row.  Two
    # stores instead of a concat (concat would materialize full-tile VMEM copies).
    if TH > 1:
        p2_main = a0_r0[1:] * w20 + b1_r0[1:] * w21 + a2_r0[1:] * w22
        o_ref[pl.ds(0, TH - 1)] = (p01[:TH - 1] + p2_main).astype(o_ref.dtype)

    h0 = xh_ref[:, pl.ds(0, OW, 2), :]
    h1 = xh_ref[:, pl.ds(1, OW, 2), :]
    h2 = xh_ref[:, pl.ds(2, OW, 2), :]
    p2_last = h0 * w20 + h1 * w21 + h2 * w22
    o_ref[pl.ds(TH - 1, 1)] = (p01[TH - 1:] + p2_last).astype(o_ref.dtype)


def _pick_tile_oh(OH, W, C, dtype_bytes=4, vmem_budget=8 * 1024 * 1024):
    """Largest divisor of OH whose double-buffered tiles fit the VMEM budget,
    preferring an even step count >= 4 so both v7x TensorCores stay busy."""
    def fits(th):
        main = 2 * th * (W + 1) * C * dtype_bytes
        out = th * (W // 2) * C * dtype_bytes
        return 2 * (main + out) <= vmem_budget          # double-buffered in + out

    cands = [t for t in range(OH, 0, -1) if OH % t == 0 and fits(t)]
    for t in cands:                                     # megacore-friendly first
        nt = OH // t
        if nt >= 4 and nt % 2 == 0:
            return t
    for t in cands:                                     # else keep the DMA pipeline
        if OH // t >= 2:
            return t
    return cands[0] if cands else 1


@partial(jax.jit, static_argnames=("tile_oh",))
def depthwise_conv3x3_stride2(x_nchw, w_oihw, *, tile_oh=None):
    """PyTorch-layout entry: x (N, C, H, W), w (C, 1, 3, 3) -> (N, C, OH, OW)."""
    N, C, H, W = x_nchw.shape
    assert w_oihw.shape == (C, 1, 3, 3)
    # TODO(synk): odd spatial sizes / other strides not handled (module uses 112x112).
    assert H % 2 == 0 and W % 2 == 0, "even spatial sizes only"
    OH, OW = H // 2, W // 2

    TH = _pick_tile_oh(OH, W, C) if tile_oh is None else tile_oh
    assert OH % TH == 0, (OH, TH)
    nt = OH // TH

    # Single wrapper layout pass: channels-last transpose fused with the top/left
    # zero pad (bottom/right pad is never read for even H, W with stride 2).
    x_nhwc = jnp.transpose(x_nchw, (0, 2, 3, 1))                 # (N, H, W, C)
    xpad = jnp.pad(x_nhwc, ((0, 0), (1, 0), (1, 0), (0, 0)))     # (N, H+1, W+1, C)
    w9c = jnp.transpose(w_oihw[:, 0], (1, 2, 0)).reshape(9, C)   # (9, C), k = 3*kh+kw

    x_main_spec = pl.BlockSpec((None, 2 * TH, W + 1, C), lambda n, i: (n, i, 0, 0))
    x_halo_spec = pl.BlockSpec((None, 1, W + 1, C),
                               lambda n, i: (n, 2 * (i + 1) * TH, 0, 0))
    w_spec = pl.BlockSpec((9, C), lambda n, i: (0, 0))
    out_spec = pl.BlockSpec((None, TH, OW, C), lambda n, i: (n, i, 0, 0))

    out_nhwc = pl.pallas_call(
        _dw3x3_s2_kernel,
        out_shape=jax.ShapeDtypeStruct((N, OH, OW, C), x_nchw.dtype),
        grid=(N, nt),
        in_specs=[x_main_spec, x_halo_spec, w_spec],
        out_specs=out_spec,
        compiler_params=pltpu.CompilerParams(
            dimension_semantics=("parallel", "parallel"),   # megacore sharding on v7x
            vmem_limit_bytes=32 * 1024 * 1024,
        ),
    )(xpad, xpad, w9c)

    return jnp.transpose(out_nhwc, (0, 3, 1, 2))                 # (N, C, OH, OW)


if __name__ == "__main__":
    key = jax.random.PRNGKey(0)
    kx, kw = jax.random.split(key)

    # Small shapes consistent with the module: C=96 is fixed by the depthwise conv;
    # spatial reduced from 112x112 to 32x32 (OH=16 -> TH=4, nt=4) and batch=2 to
    # exercise the batched grid while keeping the example small.
    N, C, H, W = 2, 96, 32, 32
    x = jax.random.normal(kx, (N, C, H, W), dtype=jnp.float32)
    # Conv2d(96, 96, 3, stride=2, padding=1, groups=96, bias=False) weights.
    w = 0.1 * jax.random.normal(kw, (C, 1, 3, 3), dtype=jnp.float32)

    out = depthwise_conv3x3_stride2(x, w)
    out = jax.block_until_ready(out)
    assert out.shape == (N, C, H // 2, W // 2), out.shape

    # Reference check against XLA's grouped convolution.
    ref = jax.lax.conv_general_dilated(
        x, w, window_strides=(2, 2), padding=((1, 1), (1, 1)),
        dimension_numbers=("NCHW", "OIHW", "NCHW"), feature_group_count=C)
    np.testing.assert_allclose(np.asarray(out), np.asarray(ref), rtol=1e-4, atol=1e-4)

    print("KERNEL_OK")
</pallas_src>

<mosaic_0001>
module attributes {stable_mosaic.version = 11 : i64} {
  func.func @_dw3x3_s2_kernel(%arg0: i32, %arg1: i32, %arg2: memref<1x8x33x96xf32, #tpu.memory_space<vmem>>, %arg3: memref<1x1x33x96xf32, #tpu.memory_space<vmem>>, %arg4: memref<9x96xf32, #tpu.memory_space<vmem>>, %arg5: memref<1x4x16x96xf32, #tpu.memory_space<vmem>>) attributes {dimension_semantics = [#tpu.dimension_semantics<parallel>, #tpu.dimension_semantics<parallel>], iteration_bounds = array<i64: 2, 4>, scalar_prefetch = 0 : i64, scratch_operands = 0 : i64, tpu.core_type = #tpu.core_type<tc>, window_params = [{transform_indices = @transform_0, window_bounds = array<i64: 1, 8, 33, 96>}, {transform_indices = @transform_1, window_bounds = array<i64: 1, 1, 33, 96>}, {pipeline_mode = #tpu.pipeline_mode<synchronous>, transform_indices = @transform_2, window_bounds = array<i64: 9, 96>}, {transform_indices = @transform_3, window_bounds = array<i64: 1, 4, 16, 96>}]} {
    %c0 = arith.constant 0 : index
    %c0_0 = arith.constant 0 : index
    %0 = vector.load %arg4[%c0, %c0_0] : memref<9x96xf32, #tpu.memory_space<vmem>>, vector<9x96xf32>
    %1 = vector.extract_strided_slice %0 {offsets = [0, 0], sizes = [1, 96], strides = [1, 1]} : vector<9x96xf32> to vector<1x96xf32>
    %2 = vector.shape_cast %1 : vector<1x96xf32> to vector<96xf32>
    %3 = vector.extract_strided_slice %0 {offsets = [1, 0], sizes = [1, 96], strides = [1, 1]} : vector<9x96xf32> to vector<1x96xf32>
    %4 = vector.shape_cast %3 : vector<1x96xf32> to vector<96xf32>
    %5 = vector.extract_strided_slice %0 {offsets = [2, 0], sizes = [1, 96], strides = [1, 1]} : vector<9x96xf32> to vector<1x96xf32>
    %6 = vector.shape_cast %5 : vector<1x96xf32> to vector<96xf32>
    %7 = vector.extract_strided_slice %0 {offsets = [3, 0], sizes = [1, 96], strides = [1, 1]} : vector<9x96xf32> to vector<1x96xf32>
    %8 = vector.shape_cast %7 : vector<1x96xf32> to vector<96xf32>
    %9 = vector.extract_strided_slice %0 {offsets = [4, 0], sizes = [1, 96], strides = [1, 1]} : vector<9x96xf32> to vector<1x96xf32>
    %10 = vector.shape_cast %9 : vector<1x96xf32> to vector<96xf32>
    %11 = vector.extract_strided_slice %0 {offsets = [5, 0], sizes = [1, 96], strides = [1, 1]} : vector<9x96xf32> to vector<1x96xf32>
    %12 = vector.shape_cast %11 : vector<1x96xf32> to vector<96xf32>
    %13 = vector.extract_strided_slice %0 {offsets = [6, 0], sizes = [1, 96], strides = [1, 1]} : vector<9x96xf32> to vector<1x96xf32>
    %14 = vector.shape_cast %13 : vector<1x96xf32> to vector<96xf32>
    %15 = vector.extract_strided_slice %0 {offsets = [7, 0], sizes = [1, 96], strides = [1, 1]} : vector<9x96xf32> to vector<1x96xf32>
    %16 = vector.shape_cast %15 : vector<1x96xf32> to vector<96xf32>
    %17 = vector.extract_strided_slice %0 {offsets = [8, 0], sizes = [1, 96], strides = [1, 1]} : vector<9x96xf32> to vector<1x96xf32>
    %18 = vector.shape_cast %17 : vector<1x96xf32> to vector<96xf32>
    %c0_1 = arith.constant 0 : index
    %c0_2 = arith.constant 0 : index
    %c0_3 = arith.constant 0 : index
    %c0_4 = arith.constant 0 : index
    %19 = tpu.strided_load %arg2[%c0_1, %c0_2, %c0_3, %c0_4] {strides = array<i32: 1, 1, 2, 1>} : memref<1x8x33x96xf32, #tpu.memory_space<vmem>>, vector<1x8x16x96xf32>
    %20 = vector.shape_cast %19 : vector<1x8x16x96xf32> to vector<8x16x96xf32>
    %c0_5 = arith.constant 0 : index
    %c0_6 = arith.constant 0 : index
    %c1 = arith.constant 1 : index
    %c0_7 = arith.constant 0 : index
    %21 = tpu.strided_load %arg2[%c0_5, %c0_6, %c1, %c0_7] {strides = array<i32: 1, 1, 2, 1>} : memref<1x8x33x96xf32, #tpu.memory_space<vmem>>, vector<1x8x16x96xf32>
    %22 = vector.shape_cast %21 : vector<1x8x16x96xf32> to vector<8x16x96xf32>
    %c0_8 = arith.constant 0 : index
    %c0_9 = arith.constant 0 : index
    %c2 = arith.constant 2 : index
    %c0_10 = arith.constant 0 : index
    %23 = tpu.strided_load %arg2[%c0_8, %c0_9, %c2, %c0_10] {strides = array<i32: 1, 1, 2, 1>} : memref<1x8x33x96xf32, #tpu.memory_space<vmem>>, vector<1x8x16x96xf32>
    %24 = vector.shape_cast %23 : vector<1x8x16x96xf32> to vector<8x16x96xf32>
    %25 = vector.shape_cast %20 : vector<8x16x96xf32> to vector<4x2x16x96xf32>
    %26 = vector.shape_cast %22 : vector<8x16x96xf32> to vector<4x2x16x96xf32>
    %27 = vector.shape_cast %24 : vector<8x16x96xf32> to vector<4x2x16x96xf32>
    %28 = vector.extract_strided_slice %25 {offsets = [0, 0, 0, 0], sizes = [4, 1, 16, 96], strides = [1, 1, 1, 1]} : vector<4x2x16x96xf32> to vector<4x1x16x96xf32>
    %29 = vector.shape_cast %28 : vector<4x1x16x96xf32> to vector<4x16x96xf32>
    %30 = vector.extract_strided_slice %25 {offsets = [0, 1, 0, 0], sizes = [4, 1, 16, 96], strides = [1, 1, 1, 1]} : vector<4x2x16x96xf32> to vector<4x1x16x96xf32>
    %31 = vector.shape_cast %30 : vector<4x1x16x96xf32> to vector<4x16x96xf32>
    %32 = vector.extract_strided_slice %26 {offsets = [0, 0, 0, 0], sizes = [4, 1, 16, 96], strides = [1, 1, 1, 1]} : vector<4x2x16x96xf32> to vector<4x1x16x96xf32>
    %33 = vector.shape_cast %32 : vector<4x1x16x96xf32> to vector<4x16x96xf32>
    %34 = vector.extract_strided_slice %26 {offsets = [0, 1, 0, 0], sizes = [4, 1, 16, 96], strides = [1, 1, 1, 1]} : vector<4x2x16x96xf32> to vector<4x1x16x96xf32>
    %35 = vector.shape_cast %34 : vector<4x1x16x96xf32> to vector<4x16x96xf32>
    %36 = vector.extract_strided_slice %27 {offsets = [0, 0, 0, 0], sizes = [4, 1, 16, 96], strides = [1, 1, 1, 1]} : vector<4x2x16x96xf32> to vector<4x1x16x96xf32>
    %37 = vector.shape_cast %36 : vector<4x1x16x96xf32> to vector<4x16x96xf32>
    %38 = vector.extract_strided_slice %27 {offsets = [0, 1, 0, 0], sizes = [4, 1, 16, 96], strides = [1, 1, 1, 1]} : vector<4x2x16x96xf32> to vector<4x1x16x96xf32>
    %39 = vector.shape_cast %38 : vector<4x1x16x96xf32> to vector<4x16x96xf32>
    %40 = vector.shape_cast %2 : vector<96xf32> to vector<1x1x96xf32>
    %41 = vector.broadcast %40 : vector<1x1x96xf32> to vector<4x16x96xf32>
    %42 = arith.mulf %29, %41 : vector<4x16x96xf32>
    %43 = vector.shape_cast %4 : vector<96xf32> to vector<1x1x96xf32>
    %44 = vector.broadcast %43 : vector<1x1x96xf32> to vector<4x16x96xf32>
    %45 = arith.mulf %33, %44 : vector<4x16x96xf32>
    %46 = arith.addf %42, %45 : vector<4x16x96xf32>
    %47 = vector.shape_cast %6 : vector<96xf32> to vector<1x1x96xf32>
    %48 = vector.broadcast %47 : vector<1x1x96xf32> to vector<4x16x96xf32>
    %49 = arith.mulf %37, %48 : vector<4x16x96xf32>
    %50 = arith.addf %46, %49 : vector<4x16x96xf32>
    %51 = vector.shape_cast %8 : vector<96xf32> to vector<1x1x96xf32>
    %52 = vector.broadcast %51 : vector<1x1x96xf32> to vector<4x16x96xf32>
    %53 = arith.mulf %31, %52 : vector<4x16x96xf32>
    %54 = vector.shape_cast %10 : vector<96xf32> to vector<1x1x96xf32>
    %55 = vector.broadcast %54 : vector<1x1x96xf32> to vector<4x16x96xf32>
    %56 = arith.mulf %35, %55 : vector<4x16x96xf32>
    %57 = arith.addf %53, %56 : vector<4x16x96xf32>
    %58 = vector.shape_cast %12 : vector<96xf32> to vector<1x1x96xf32>
    %59 = vector.broadcast %58 : vector<1x1x96xf32> to vector<4x16x96xf32>
    %60 = arith.mulf %39, %59 : vector<4x16x96xf32>
    %61 = arith.addf %57, %60 : vector<4x16x96xf32>
    %62 = arith.addf %50, %61 : vector<4x16x96xf32>
    %63 = vector.extract_strided_slice %29 {offsets = [1, 0, 0], sizes = [3, 16, 96], strides = [1, 1, 1]} : vector<4x16x96xf32> to vector<3x16x96xf32>
    %64 = vector.shape_cast %14 : vector<96xf32> to vector<1x1x96xf32>
    %65 = vector.broadcast %64 : vector<1x1x96xf32> to vector<3x16x96xf32>
    %66 = arith.mulf %63, %65 : vector<3x16x96xf32>
    %67 = vector.extract_strided_slice %33 {offsets = [1, 0, 0], sizes = [3, 16, 96], strides = [1, 1, 1]} : vector<4x16x96xf32> to vector<3x16x96xf32>
    %68 = vector.shape_cast %16 : vector<96xf32> to vector<1x1x96xf32>
    %69 = vector.broadcast %68 : vector<1x1x96xf32> to vector<3x16x96xf32>
    %70 = arith.mulf %67, %69 : vector<3x16x96xf32>
    %71 = arith.addf %66, %70 : vector<3x16x96xf32>
    %72 = vector.extract_strided_slice %37 {offsets = [1, 0, 0], sizes = [3, 16, 96], strides = [1, 1, 1]} : vector<4x16x96xf32> to vector<3x16x96xf32>
    %73 = vector.shape_cast %18 : vector<96xf32> to vector<1x1x96xf32>
    %74 = vector.broadcast %73 : vector<1x1x96xf32> to vector<3x16x96xf32>
    %75 = arith.mulf %72, %74 : vector<3x16x96xf32>
    %76 = arith.addf %71, %75 : vector<3x16x96xf32>
    %77 = vector.extract_strided_slice %62 {offsets = [0, 0, 0], sizes = [3, 16, 96], strides = [1, 1, 1]} : vector<4x16x96xf32> to vector<3x16x96xf32>
    %78 = arith.addf %77, %76 : vector<3x16x96xf32>
    %c0_11 = arith.constant 0 : index
    %c0_12 = arith.constant 0 : index
    %c0_13 = arith.constant 0 : index
    %c0_14 = arith.constant 0 : index
    %79 = vector.load %arg5[%c0_11, %c0_12, %c0_13, %c0_14] : memref<1x4x16x96xf32, #tpu.memory_space<vmem>>, vector<1x3x16x96xf32>
    %80 = vector.shape_cast %79 : vector<1x3x16x96xf32> to vector<3x16x96xf32>
    %81 = vector.shape_cast %78 : vector<3x16x96xf32> to vector<1x3x16x96xf32>
    tpu.vector_store %arg5[%c0_11, %c0_12, %c0_13, %c0_14], %81 {strides = array<i32>} : memref<1x4x16x96xf32, #tpu.memory_space<vmem>>, vector<1x3x16x96xf32>,
    %c0_15 = arith.constant 0 : index
    %c0_16 = arith.constant 0 : index
    %c0_17 = arith.constant 0 : index
    %c0_18 = arith.constant 0 : index
    %82 = tpu.strided_load %arg3[%c0_15, %c0_16, %c0_17, %c0_18] {strides = array<i32: 1, 1, 2, 1>} : memref<1x1x33x96xf32, #tpu.memory_space<vmem>>, vector<1x1x16x96xf32>
    %83 = vector.shape_cast %82 : vector<1x1x16x96xf32> to vector<1x16x96xf32>
    %c0_19 = arith.constant 0 : index
    %c0_20 = arith.constant 0 : index
    %c1_21 = arith.constant 1 : index
    %c0_22 = arith.constant 0 : index
    %84 = tpu.strided_load %arg3[%c0_19, %c0_20, %c1_21, %c0_22] {strides = array<i32: 1, 1, 2, 1>} : memref<1x1x33x96xf32, #tpu.memory_space<vmem>>, vector<1x1x16x96xf32>
    %85 = vector.shape_cast %84 : vector<1x1x16x96xf32> to vector<1x16x96xf32>
    %c0_23 = arith.constant 0 : index
    %c0_24 = arith.constant 0 : index
    %c2_25 = arith.constant 2 : index
    %c0_26 = arith.constant 0 : index
    %86 = tpu.strided_load %arg3[%c0_23, %c0_24, %c2_25, %c0_26] {strides = array<i32: 1, 1, 2, 1>} : memref<1x1x33x96xf32, #tpu.memory_space<vmem>>, vector<1x1x16x96xf32>
    %87 = vector.shape_cast %86 : vector<1x1x16x96xf32> to vector<1x16x96xf32>
    %88 = vector.shape_cast %14 : vector<96xf32> to vector<1x1x96xf32>
    %89 = vector.broadcast %88 : vector<1x1x96xf32> to vector<1x16x96xf32>
    %90 = arith.mulf %83, %89 : vector<1x16x96xf32>
    %91 = vector.shape_cast %16 : vector<96xf32> to vector<1x1x96xf32>
    %92 = vector.broadcast %91 : vector<1x1x96xf32> to vector<1x16x96xf32>
    %93 = arith.mulf %85, %92 : vector<1x16x96xf32>
    %94 = arith.addf %90, %93 : vector<1x16x96xf32>
    %95 = vector.shape_cast %18 : vector<96xf32> to vector<1x1x96xf32>
    %96 = vector.broadcast %95 : vector<1x1x96xf32> to vector<1x16x96xf32>
    %97 = arith.mulf %87, %96 : vector<1x16x96xf32>
    %98 = arith.addf %94, %97 : vector<1x16x96xf32>
    %99 = vector.extract_strided_slice %62 {offsets = [3, 0, 0], sizes = [1, 16, 96], strides = [1, 1, 1]} : vector<4x16x96xf32> to vector<1x16x96xf32>
    %100 = arith.addf %99, %98 : vector<1x16x96xf32>
    %c0_27 = arith.constant 0 : index
    %c3 = arith.constant 3 : index
    %c0_28 = arith.constant 0 : index
    %c0_29 = arith.constant 0 : index
    %101 = vector.load %arg5[%c0_27, %c3, %c0_28, %c0_29] : memref<1x4x16x96xf32, #tpu.memory_space<vmem>>, vector<1x1x16x96xf32>
    %102 = vector.shape_cast %101 : vector<1x1x16x96xf32> to vector<1x16x96xf32>
    %103 = vector.shape_cast %100 : vector<1x16x96xf32> to vector<1x1x16x96xf32>
    tpu.vector_store %arg5[%c0_27, %c3, %c0_28, %c0_29], %103 {strides = array<i32>} : memref<1x4x16x96xf32, #tpu.memory_space<vmem>>, vector<1x1x16x96xf32>,
    return
  }
  func.func @transform_0(%arg0: i32, %arg1: i32) -> (i32, i32, i32, i32) {
    %c0_i32 = arith.constant 0 : i32
    %c0_i32_0 = arith.constant 0 : i32
    %c0_i32_1 = arith.constant 0 : i32
    return %arg0, %arg1, %c0_i32, %c0_i32_0 : i32, i32, i32, i32
  }
  func.func @transform_1(%arg0: i32, %arg1: i32) -> (i32, i32, i32, i32) {
    %c1_i32 = arith.constant 1 : i32
    %0 = arith.addi %arg1, %c1_i32 : i32
    %c2_i32 = arith.constant 2 : i32
    %1 = arith.muli %c2_i32, %0 : i32
    %c4_i32 = arith.constant 4 : i32
    %2 = arith.muli %1, %c4_i32 : i32
    %c0_i32 = arith.constant 0 : i32
    %c0_i32_0 = arith.constant 0 : i32
    %c0_i32_1 = arith.constant 0 : i32
    return %arg0, %2, %c0_i32, %c0_i32_0 : i32, i32, i32, i32
  }
  func.func @transform_2(%arg0: i32, %arg1: i32) -> (i32, i32) {
    %c0_i32 = arith.constant 0 : i32
    %c0_i32_0 = arith.constant 0 : i32
    %c0_i32_1 = arith.constant 0 : i32
    return %c0_i32, %c0_i32_0 : i32, i32
  }
  func.func @transform_3(%arg0: i32, %arg1: i32) -> (i32, i32, i32, i32) {
    %c0_i32 = arith.constant 0 : i32
    %c0_i32_0 = arith.constant 0 : i32
    %c0_i32_1 = arith.constant 0 : i32
    return %arg0, %arg1, %c0_i32, %c0_i32_0 : i32, i32, i32, i32
  }
}

</mosaic_0001>

<llo_original>
// kernel: depthwise_conv3x3_stride2.1
$region0: #{depthwise_conv3x3_stride2.1}
  #allocation0 [shape = 'u32[]', space=smem, size = 0x4, offset = 0x4, fixed_abs, tag = 'smem constant byte address 0x4 - core index']
  #allocation1 [shape = 'u32[144,128]{1,0:T(1,128)}', space=vmem, size = 0x12000, scoped, tag = 'internal scratch']
  %s0 = inlined_call_operand.vmem [shape: f32[2,33,33,96], index: 0, kind: input, shape index: {}, may-alias: {0,1}]
  %s1 = inlined_call_operand.vmem [shape: f32[2,33,33,96], index: 1, kind: input, shape index: {}, may-alias: {0,1}]
  %s2 = inlined_call_operand.vmem [shape: f32[9,96], index: 2, kind: input, shape index: {}]
  %s3 = inlined_call_operand.hbm [shape: f32[2,16,16,96], index: 3, kind: output, shape index: {}]
  %s4 = sld [smem:[#allocation0]]
  $region45: #{depthwise_conv3x3_stride2.1} parent=0
    _
  %s6 = ssub.s32 1, %s4
  %s7 = scalar_select 0, %s6, %s4
  $region1: #{depthwise_conv3x3_stride2.1} parent=0
    #allocation2 [shape = 'u8[65536]{0}', space=vmem, size = 0x10000, scoped, tag = 'output window, operand 0']
    #allocation3 [shape = 's32[2]{0}', space=sflag, size = 0x8, scoped, tag = 'scoped memory for depthwise_conv3x3_stride2.1']
    %8 = vsyncpa [#allocation3], 0
    %s9 = scalar_lea.sflag [#allocation3], 1
    %10 = vsyncpa %s9, 0
    loop: start=0, step=1, limit=10
    $region2: #{depthwise_conv3x3_stride2.1} parent=1 // loop_pre_header
      _
    $region3: #{depthwise_conv3x3_stride2.1} parent=1 // loop_header
      %s12 = sphi 0, %s16
      %p13 = scmp.ge.s32.totalorder %s12, 10
      %s19 = sphi 0, %s31
      %s20 = sphi 0, %s27
      %s21 = sphi 0, %s19
      %s22 = sphi 0, %s20
      %s23 = sphi 0, %s21
      %s24 = sphi 0, %s22
      %s36 = sphi 0, %s38
      %s39 = sphi 0, %s36
      %s40 = sphi 0, %s39
      %s56 = sphi 0, %s40
      %s68 = sphi 0, %s70
      %s71 = sphi 0, %s68
      %s72 = sphi 0, %s71
      %s88 = sphi 0, %s72
      %s92 = sphi 0, %s92
      %s94 = sphi 0, %s92
      %s95 = sphi 0, %s94
      %s109 = sphi 0, %s95
      %s117 = sphi 0, %s119
      %s120 = sphi 0, %s117
      %s121 = sphi 0, %s120
      %s137 = sphi 0, %s121
    $region4: #{depthwise_conv3x3_stride2.1} parent=1 // loop_header_branch
      %15 = sbr.rel (%p13) target = $region8
    $region5: #{depthwise_conv3x3_stride2.1} parent=1 // loop_body
      %s17 = ssub.s32 %s12, 1
      %s18 = ssub.s32 %s12, 2
      %s25 = sadd.s32 1, %s20
      %p26 = scmp.ge.s32.totalorder %s25, 4
      %s27 = scalar_select %p26, 0, %s25
      %s28 = sadd.s32 1, %s19
      %s29 = scalar_select %p26, %s28, %s19
      %p30 = scmp.ge.s32.totalorder %s29, 2
      %s31 = scalar_select %p30, 0, %s29
      %s32 = ssub.s32 %s19, %s31
      %s33 = ssub.s32 %s20, %s27
      %s34 = sor.u32 %s32, %s33
      %p35 = scmp.eq.s32.totalorder %s34, 0
      %s37 = sadd.s32 %s36, 1
      %s38 = scalar_select %p35, %s36, %s37
      %p41 = pneg %p35
      %p42 = scmp.eq.s32.totalorder %s12, 7
      %p43 = por %p41, %p42
      %p44 = scmp.ne.s32.totalorder %s36, %s39
      %p45 = scmp.eq.s32.totalorder %s12, 0
      %p46 = por %p44, %p45
      %p47 = scmp.ne.s32.totalorder %s36, %s39
      %p48 = scmp.eq.s32.totalorder %s17, 7
      %p49 = por %p47, %p48
      %p50 = scmp.ne.s32.totalorder %s39, %s40
      %p51 = scmp.eq.s32.totalorder %s17, 0
      %p52 = por %p50, %p51
      %p53 = scmp.ne.s32.totalorder %s39, %s40
      %p54 = scmp.eq.s32.totalorder %s18, 7
      %p55 = por %p53, %p54
      %p57 = scmp.ne.s32.totalorder %s40, %s56
      %p58 = scmp.eq.s32.totalorder %s18, 0
      %p59 = por %p57, %p58
      %s60 = sadd.s32 %s20, 1
      %s61 = smul.u32 %s60, 8
      %s62 = sadd.s32 %s27, 1
      %s63 = smul.u32 %s62, 8
      %s64 = ssub.s32 %s19, %s31
      %s65 = ssub.s32 %s61, %s63
      %s66 = sor.u32 %s64, %s65
      %p67 = scmp.eq.s32.totalorder %s66, 0
      %s69 = sadd.s32 %s68, 1
      %s70 = scalar_select %p67, %s68, %s69
      %p73 = pneg %p67
      %p74 = scmp.eq.s32.totalorder %s12, 7
      %p75 = por %p73, %p74
      %p76 = scmp.ne.s32.totalorder %s68, %s71
      %p77 = scmp.eq.s32.totalorder %s12, 0
      %p78 = por %p76, %p77
      %p79 = scmp.ne.s32.totalorder %s68, %s71
      %p80 = scmp.eq.s32.totalorder %s17, 7
      %p81 = por %p79, %p80
      %p82 = scmp.ne.s32.totalorder %s71, %s72
      %p83 = scmp.eq.s32.totalorder %s17, 0
      %p84 = por %p82, %p83
      %p85 = scmp.ne.s32.totalorder %s71, %s72
      %p86 = scmp.eq.s32.totalorder %s18, 7
      %p87 = por %p85, %p86
      %p89 = scmp.ne.s32.totalorder %s72, %s88
      %p90 = scmp.eq.s32.totalorder %s18, 0
      %p91 = por %p89, %p90
      %s93 = sadd.s32 %s92, 1
      %p96 = scmp.eq.s32.totalorder %s12, 7
      %p97 = scmp.ne.s32.totalorder %s92, %s94
      %p98 = scmp.eq.s32.totalorder %s12, 0
      %p99 = por %p97, %p98
      %p100 = scmp.ne.s32.totalorder %s92, %s94
      %p101 = scmp.eq.s32.totalorder %s17, 7
      %p102 = por %p100, %p101
      %p103 = scmp.ne.s32.totalorder %s94, %s95
      %p104 = scmp.eq.s32.totalorder %s17, 0
      %p105 = por %p103, %p104
      %p106 = scmp.ne.s32.totalorder %s94, %s95
      %p107 = scmp.eq.s32.totalorder %s18, 7
      %p108 = por %p106, %p107
      %p110 = scmp.ne.s32.totalorder %s95, %s109
      %p111 = scmp.eq.s32.totalorder %s18, 0
      %p112 = por %p110, %p111
      %s113 = ssub.s32 %s19, %s31
      %s114 = ssub.s32 %s20, %s27
      %s115 = sor.u32 %s113, %s114
      %p116 = scmp.eq.s32.totalorder %s115, 0
      %s118 = sadd.s32 %s117, 1
      %s119 = scalar_select %p116, %s117, %s118
      %p122 = pneg %p116
      %p123 = scmp.eq.s32.totalorder %s12, 7
      %p124 = por %p122, %p123
      %p125 = scmp.ne.s32.totalorder %s117, %s120
      %p126 = scmp.eq.s32.totalorder %s12, 0
      %p127 = por %p125, %p126
      %p128 = scmp.ne.s32.totalorder %s117, %s120
      %p129 = scmp.eq.s32.totalorder %s17, 7
      %p130 = por %p128, %p129
      %p131 = scmp.ne.s32.totalorder %s120, %s121
      %p132 = scmp.eq.s32.totalorder %s17, 0
      %p133 = por %p131, %p132
      %p134 = scmp.ne.s32.totalorder %s120, %s121
      %p135 = scmp.eq.s32.totalorder %s18, 7
      %p136 = por %p134, %p135
      %p138 = scmp.ne.s32.totalorder %s121, %s137
      %p139 = scmp.eq.s32.totalorder %s18, 0
      %p140 = por %p138, %p139
      %p141 = scmp.le.s32.totalorder 1, %s12
      %p142 = scmp.lt.s32.totalorder %s12, 9
      %p143 = pnand %p141, %p142
      %p144 = pneg %p143
      // Predicated region
      $region9: #{depthwise_conv3x3_stride2.1} parent=5 // pred_check
        _
      $region10: #{depthwise_conv3x3_stride2.1} parent=5 // pred_check_branch
        %146 = sbr.rel (%p143) target = $region12
      $region11: #{depthwise_conv3x3_stride2.1} parent=5 // pred_region
        %s147 = ssub.s32 %s12, 1
        // Predicated region
        $region13: #{depthwise_conv3x3_stride2.1} parent=11 // pred_check
          %p148 = pneg %p105
        $region14: #{depthwise_conv3x3_stride2.1} parent=11 // pred_check_branch
          %150 = sbr.rel (%p148) target = $region16
        $region15: #{depthwise_conv3x3_stride2.1} parent=11 // pred_region
          _
        $region16: #{depthwise_conv3x3_stride2.1} parent=11 // pred_fallthru
          _
      $region12: #{depthwise_conv3x3_stride2.1} parent=5 // pred_fallthru
        _
      %p151 = scmp.lt.s32.totalorder %s12, 8
      // Predicated region
      $region17: #{depthwise_conv3x3_stride2.1} parent=5 // pred_check
        %p152 = pneg %p151
      $region18: #{depthwise_conv3x3_stride2.1} parent=5 // pred_check_branch
        %154 = sbr.rel (%p152) target = $region20
      $region19: #{depthwise_conv3x3_stride2.1} parent=5 // pred_region
        // Predicated region
        $region21: #{depthwise_conv3x3_stride2.1} parent=19 // pred_check
          %p155 = pneg %p46
        $region22: #{depthwise_conv3x3_stride2.1} parent=19 // pred_check_branch
          %157 = sbr.rel (%p155) target = $region24
        $region23: #{depthwise_conv3x3_stride2.1} parent=19 // pred_region
          %s158 = smul.u32 8, %s20
          %s159 = ssub.s32 33, %s158
          %p160 = scmp.lt.s32.totalorder %s159, 8
          %s161 = scalar_select %p160, %s159, 8
          %s162 = smul.u32 128, %s161
          %s163 = smul.u32 %s162, 5
          %p164 = scmp.lt.s32.totalorder %s19, 1
          %s165 = scalar_select %p164, %s19, 1
          %p166 = scmp.lt.s32.totalorder %s158, 32
          %s167 = scalar_select %p166, %s158, 32
          %s168 = smul.addr %s167, 5
          %s169 = smul.addr %s165, 165
          %s170 = sadd.s32 %s168, %s169
          %s171 = smul.addr %s170, 8
          %s172 = scalar_lea.vmem %s0, %s171
          %s173 = smul.u32 8, %s20
          %s174 = ssub.s32 33, %s173
          %p175 = scmp.lt.s32.totalorder %s174, 8
          %s176 = scalar_select %p175, %s174, 8
          %s177 = smul.u32 128, %s176
          %s178 = smul.u32 %s177, 5
        $region24: #{depthwise_conv3x3_stride2.1} parent=19 // pred_fallthru
          _
        // Predicated region
        $region25: #{depthwise_conv3x3_stride2.1} parent=19 // pred_check
          %p179 = pneg %p78
        $region26: #{depthwise_conv3x3_stride2.1} parent=19 // pred_check_branch
          %181 = sbr.rel (%p179) target = $region28
        $region27: #{depthwise_conv3x3_stride2.1} parent=19 // pred_region
          %s182 = sadd.s32 %s20, 1
          %s183 = smul.u32 %s182, 8
          %p184 = scmp.lt.s32.totalorder %s19, 1
          %s185 = scalar_select %p184, %s19, 1
          %p186 = scmp.lt.s32.totalorder %s183, 32
          %s187 = scalar_select %p186, %s183, 32
          %s188 = smul.addr %s187, 5
          %s189 = smul.addr %s185, 165
          %s190 = sadd.s32 %s188, %s189
          %s191 = smul.addr %s190, 8
          %s192 = scalar_lea.vmem %s1, %s191
          %s193 = sadd.s32 %s20, 1
          %s194 = smul.u32 %s193, 8
        $region28: #{depthwise_conv3x3_stride2.1} parent=19 // pred_fallthru
          _
      $region20: #{depthwise_conv3x3_stride2.1} parent=5 // pred_fallthru
        _
      %p195 = scmp.le.s32.totalorder 1, %s12
      %p196 = scmp.lt.s32.totalorder %s12, 9
      %p197 = pnand %p195, %p196
      %p198 = pneg %p197
      // Predicated region
      $region29: #{depthwise_conv3x3_stride2.1} parent=5 // pred_check
        _
      $region30: #{depthwise_conv3x3_stride2.1} parent=5 // pred_check_branch
        %200 = sbr.rel (%p197) target = $region32
      $region31: #{depthwise_conv3x3_stride2.1} parent=5 // pred_region
        %s201 = ssub.s32 %s12, 1
        %s202 = smul.u32 8, %s22
        %s203 = ssub.s32 33, %s202
        %p204 = scmp.lt.s32.totalorder %s203, 8
        %s205 = scalar_select %p204, %s203, 8
        %s206 = smul.u32 128, %s205
        %s207 = smul.u32 %s206, 5
        %p208 = scmp.lt.s32.totalorder %s21, 1
        %s209 = scalar_select %p208, %s21, 1
        %p210 = scmp.lt.s32.totalorder %s202, 32
        %s211 = scalar_select %p210, %s202, 32
        %s212 = smul.addr %s211, 5
        %s213 = smul.addr %s209, 165
        %s214 = sadd.s32 %s212, %s213
        %s215 = smul.addr %s214, 8
        %s216 = scalar_lea.vmem %s0, %s215
        %p217 = pneg %p52
        %p218 = pneg %p49
        %s219 = sadd.s32 %s22, 1
        %s220 = smul.u32 %s219, 8
        %p221 = scmp.lt.s32.totalorder %s21, 1
        %s222 = scalar_select %p221, %s21, 1
        %p223 = scmp.lt.s32.totalorder %s220, 32
        %s224 = scalar_select %p223, %s220, 32
        %s225 = smul.addr %s224, 5
        %s226 = smul.addr %s222, 165
        %s227 = sadd.s32 %s225, %s226
        %s228 = smul.addr %s227, 8
        %s229 = scalar_lea.vmem %s1, %s228
        %p230 = pneg %p84
        %p231 = pneg %p81
        %p232 = pneg %p105
        %p233 = pneg %p102
        %p234 = pneg %p133
        %p235 = pneg %p130
        %s236 = sand.u32 %s120, 1
        %s237 = scalar_lea.sflag [#allocation3], %s236
        %s238 = sand.u32 %s120, 1
        %s239 = smul.addr %s238, 64
        %s240 = scalar_lea.vmem [#allocation2], %s239
        %s241 = smul.u32 8, %s22
        %s242 = ssub.s32 33, %s241
        %p243 = scmp.lt.s32.totalorder %s242, 8
        %s244 = scalar_select %p243, %s242, 8
        %s245 = smul.u32 128, %s244
        %s246 = smul.u32 %s245, 5
        %p247 = scmp.lt.s32.totalorder %s21, 1
        %s248 = scalar_select %p247, %s21, 1
        %p249 = scmp.lt.s32.totalorder %s241, 32
        %s250 = scalar_select %p249, %s241, 32
        %s251 = smul.addr %s250, 5
        %s252 = smul.addr %s248, 165
        %s253 = sadd.s32 %s251, %s252
        %s254 = smul.addr %s253, 8
        %s255 = scalar_lea.vmem %s0, %s254
        %s256 = smul.u32 8, %s22
        %s257 = ssub.s32 33, %s256
        %p258 = scmp.lt.s32.totalorder %s257, 8
        %s259 = scalar_select %p258, %s257, 8
        %s260 = smul.u32 128, %s259
        %s261 = smul.u32 %s260, 5
        %s262 = sadd.s32 %s22, 1
        %s263 = smul.u32 %s262, 8
        %p264 = scmp.lt.s32.totalorder %s21, 1
        %s265 = scalar_select %p264, %s21, 1
        %p266 = scmp.lt.s32.totalorder %s263, 32
        %s267 = scalar_select %p266, %s263, 32
        %s268 = smul.addr %s267, 5
        %s269 = smul.addr %s265, 165
        %s270 = sadd.s32 %s268, %s269
        %s271 = smul.addr %s270, 8
        %s272 = scalar_lea.vmem %s1, %s271
        %s273 = sadd.s32 %s22, 1
        %s274 = smul.u32 %s273, 8
        %s275 = smul.u32 4, %s22
        %v276 = vld [vmem:[%s2] sm:$0xff]
        %v277 = vld [vmem:[%s2 + $0x8] sm:$0x1]
        %v278 = vld [vmem:[%s255] ss:$2 sm:$0xff]
        %s279 = scalar_lea.vmem %s255, 16
        %v280 = vld [vmem:[%s279] ss:$2 sm:$0xff]
        %s281 = scalar_lea.vmem %s255, 40
        %v282 = vld [vmem:[%s281] ss:$2 sm:$0xff]
        %s283 = scalar_lea.vmem %s255, 56
        %v284 = vld [vmem:[%s283] ss:$2 sm:$0xff]
        %s285 = scalar_lea.vmem %s255, 80
        %v286 = vld [vmem:[%s285] ss:$2 sm:$0xff]
        %s287 = scalar_lea.vmem %s255, 96
        %v288 = vld [vmem:[%s287] ss:$2 sm:$0xff]
        %s289 = scalar_lea.vmem %s255, 120
        %v290 = vld [vmem:[%s289] ss:$2 sm:$0xff]
        %s291 = scalar_lea.vmem %s255, 136
        %v292 = vld [vmem:[%s291] ss:$2 sm:$0xff]
        %s293 = scalar_lea.vmem %s255, 160
        %v294 = vld [vmem:[%s293] ss:$2 sm:$0xff]
        %s295 = scalar_lea.vmem %s255, 176
        %v296 = vld [vmem:[%s295] ss:$2 sm:$0xff]
        %s297 = scalar_lea.vmem %s255, 200
        %v298 = vld [vmem:[%s297] ss:$2 sm:$0xff]
        %s299 = scalar_lea.vmem %s255, 216
        %v300 = vld [vmem:[%s299] ss:$2 sm:$0xff]
        %s301 = scalar_lea.vmem %s255, 240
        %v302 = vld [vmem:[%s301] ss:$2 sm:$0xff]
        %s303 = scalar_lea.vmem %s255, 256
        %v304 = vld [vmem:[%s303] ss:$2 sm:$0xff]
        %s305 = scalar_lea.vmem %s255, 280
        %v306 = vld [vmem:[%s305] ss:$2 sm:$0xff]
        %s307 = scalar_lea.vmem %s255, 296
        %v308 = vld [vmem:[%s307] ss:$2 sm:$0xff]
        %s309 = scalar_lea.vmem %s255, 1
        %v310 = vld [vmem:[%s309] ss:$2 sm:$0xff]
        %s311 = scalar_lea.vmem %s255, 17
        %v312 = vld [vmem:[%s311] ss:$2 sm:$0xff]
        %s313 = scalar_lea.vmem %s255, 41
        %v314 = vld [vmem:[%s313] ss:$2 sm:$0xff]
        %s315 = scalar_lea.vmem %s255, 57
        %v316 = vld [vmem:[%s315] ss:$2 sm:$0xff]
        %s317 = scalar_lea.vmem %s255, 81
        %v318 = vld [vmem:[%s317] ss:$2 sm:$0xff]
        %s319 = scalar_lea.vmem %s255, 97
        %v320 = vld [vmem:[%s319] ss:$2 sm:$0xff]
        %s321 = scalar_lea.vmem %s255, 121
        %v322 = vld [vmem:[%s321] ss:$2 sm:$0xff]
        %s323 = scalar_lea.vmem %s255, 137
        %v324 = vld [vmem:[%s323] ss:$2 sm:$0xff]
        %s325 = scalar_lea.vmem %s255, 161
        %v326 = vld [vmem:[%s325] ss:$2 sm:$0xff]
        %s327 = scalar_lea.vmem %s255, 177
        %v328 = vld [vmem:[%s327] ss:$2 sm:$0xff]
        %s329 = scalar_lea.vmem %s255, 201
        %v330 = vld [vmem:[%s329] ss:$2 sm:$0xff]
        %s331 = scalar_lea.vmem %s255, 217
        %v332 = vld [vmem:[%s331] ss:$2 sm:$0xff]
        %s333 = scalar_lea.vmem %s255, 241
        %v334 = vld [vmem:[%s333] ss:$2 sm:$0xff]
        %s335 = scalar_lea.vmem %s255, 257
        %v336 = vld [vmem:[%s335] ss:$2 sm:$0xff]
        %s337 = scalar_lea.vmem %s255, 281
        %v338 = vld [vmem:[%s337] ss:$2 sm:$0xff]
        %s339 = scalar_lea.vmem %s255, 297
        %v340 = vld [vmem:[%s339] ss:$2 sm:$0xff]
        %s341 = scalar_lea.vmem %s255, 2
        %v342 = vld [vmem:[%s341] ss:$2 sm:$0xff]
        %s343 = scalar_lea.vmem %s255, 18
        %v344 = vld [vmem:[%s343] ss:$2 sm:$0xff]
        %s345 = scalar_lea.vmem %s255, 42
        %v346 = vld [vmem:[%s345] ss:$2 sm:$0xff]
        %s347 = scalar_lea.vmem %s255, 58
        %v348 = vld [vmem:[%s347] ss:$2 sm:$0xff]
        %s349 = scalar_lea.vmem %s255, 82
        %v350 = vld [vmem:[%s349] ss:$2 sm:$0xff]
        %s351 = scalar_lea.vmem %s255, 98
        %v352 = vld [vmem:[%s351] ss:$2 sm:$0xff]
        %s353 = scalar_lea.vmem %s255, 122
        %v354 = vld [vmem:[%s353] ss:$2 sm:$0xff]
        %s355 = scalar_lea.vmem %s255, 138
        %v356 = vld [vmem:[%s355] ss:$2 sm:$0xff]
        %s357 = scalar_lea.vmem %s255, 162
        %v358 = vld [vmem:[%s357] ss:$2 sm:$0xff]
        %s359 = scalar_lea.vmem %s255, 178
        %v360 = vld [vmem:[%s359] ss:$2 sm:$0xff]
        %s361 = scalar_lea.vmem %s255, 202
        %v362 = vld [vmem:[%s361] ss:$2 sm:$0xff]
        %s363 = scalar_lea.vmem %s255, 218
        %v364 = vld [vmem:[%s363] ss:$2 sm:$0xff]
        %s365 = scalar_lea.vmem %s255, 242
        %v366 = vld [vmem:[%s365] ss:$2 sm:$0xff]
        %s367 = scalar_lea.vmem %s255, 258
        %v368 = vld [vmem:[%s367] ss:$2 sm:$0xff]
        %s369 = scalar_lea.vmem %s255, 282
        %v370 = vld [vmem:[%s369] ss:$2 sm:$0xff]
        %s371 = scalar_lea.vmem %s255, 298
        %v372 = vld [vmem:[%s371] ss:$2 sm:$0xff]
        %v373 = vlaneseq
        %v374 = vshrl.u32 %v373, 7
        %v375 = vsub.s32 0, %v374
        %v376 = vrot.slane %v276, %v375
        %v377 = vmul.f32 %v278, %v376
        %v378 = vmul.f32 %v280, %v376
        %v379 = vmul.f32 %v286, %v376
        %v380 = vmul.f32 %v288, %v376
        %v381 = vmul.f32 %v294, %v376
        %v382 = vmul.f32 %v296, %v376
        %v383 = vmul.f32 %v302, %v376
        %v384 = vmul.f32 %v304, %v376
        %v385 = vlaneseq
        %v386 = vshrl.u32 %v385, 7
        %v387 = vsub.s32 1, %v386
        %v388 = vrot.slane %v276, %v387
        %v389 = vmul.f32 %v310, %v388
        %v390 = vmul.f32 %v312, %v388
        %v391 = vmul.f32 %v318, %v388
        %v392 = vmul.f32 %v320, %v388
        %v393 = vmul.f32 %v326, %v388
        %v394 = vmul.f32 %v328, %v388
        %v395 = vmul.f32 %v334, %v388
        %v396 = vmul.f32 %v336, %v388
        %v397 = vadd.f32 %v377, %v389
        %v398 = vadd.f32 %v378, %v390
        %v399 = vadd.f32 %v379, %v391
        %v400 = vadd.f32 %v380, %v392
        %v401 = vadd.f32 %v381, %v393
        %v402 = vadd.f32 %v382, %v394
        %v403 = vadd.f32 %v383, %v395
        %v404 = vadd.f32 %v384, %v396
        %v405 = vlaneseq
        %v406 = vshrl.u32 %v405, 7
        %v407 = vsub.s32 2, %v406
        %v408 = vrot.slane %v276, %v407
        %v409 = vmul.f32 %v342, %v408
        %v410 = vmul.f32 %v344, %v408
        %v411 = vmul.f32 %v350, %v408
        %v412 = vmul.f32 %v352, %v408
        %v413 = vmul.f32 %v358, %v408
        %v414 = vmul.f32 %v360, %v408
        %v415 = vmul.f32 %v366, %v408
        %v416 = vmul.f32 %v368, %v408
        %v417 = vadd.f32 %v397, %v409
        %v418 = vadd.f32 %v398, %v410
        %v419 = vadd.f32 %v399, %v411
        %v420 = vadd.f32 %v400, %v412
        %v421 = vadd.f32 %v401, %v413
        %v422 = vadd.f32 %v402, %v414
        %v423 = vadd.f32 %v403, %v415
        %v424 = vadd.f32 %v404, %v416
        %v425 = vlaneseq
        %v426 = vshrl.u32 %v425, 7
        %v427 = vsub.s32 3, %v426
        %v428 = vrot.slane %v276, %v427
        %v429 = vmul.f32 %v282, %v428
        %v430 = vmul.f32 %v284, %v428
        %v431 = vmul.f32 %v290, %v428
        %v432 = vmul.f32 %v292, %v428
        %v433 = vmul.f32 %v298, %v428
        %v434 = vmul.f32 %v300, %v428
        %v435 = vmul.f32 %v306, %v428
        %v436 = vmul.f32 %v308, %v428
        %v437 = vlaneseq
        %v438 = vshrl.u32 %v437, 7
        %v439 = vsub.s32 4, %v438
        %v440 = vrot.slane %v276, %v439
        %v441 = vmul.f32 %v314, %v440
        %v442 = vmul.f32 %v316, %v440
        %v443 = vmul.f32 %v322, %v440
        %v444 = vmul.f32 %v324, %v440
        %v445 = vmul.f32 %v330, %v440
        %v446 = vmul.f32 %v332, %v440
        %v447 = vmul.f32 %v338, %v440
        %v448 = vmul.f32 %v340, %v440
        %v449 = vadd.f32 %v429, %v441
        %v450 = vadd.f32 %v430, %v442
        %v451 = vadd.f32 %v431, %v443
        %v452 = vadd.f32 %v432, %v444
        %v453 = vadd.f32 %v433, %v445
        %v454 = vadd.f32 %v434, %v446
        %v455 = vadd.f32 %v435, %v447
        %v456 = vadd.f32 %v436, %v448
        %v457 = vlaneseq
        %v458 = vshrl.u32 %v457, 7
        %v459 = vsub.s32 5, %v458
        %v460 = vrot.slane %v276, %v459
        %v461 = vmul.f32 %v346, %v460
        %v462 = vmul.f32 %v348, %v460
        %v463 = vmul.f32 %v354, %v460
        %v464 = vmul.f32 %v356, %v460
        %v465 = vmul.f32 %v362, %v460
        %v466 = vmul.f32 %v364, %v460
        %v467 = vmul.f32 %v370, %v460
        %v468 = vmul.f32 %v372, %v460
        %v469 = vadd.f32 %v449, %v461
        %v470 = vadd.f32 %v450, %v462
        %v471 = vadd.f32 %v451, %v463
        %v472 = vadd.f32 %v452, %v464
        %v473 = vadd.f32 %v453, %v465
        %v474 = vadd.f32 %v454, %v466
        %v475 = vadd.f32 %v455, %v467
        %v476 = vadd.f32 %v456, %v468
        %v477 = vadd.f32 %v417, %v469
        %v478 = vadd.f32 %v418, %v470
        %v479 = vadd.f32 %v419, %v471
        %v480 = vadd.f32 %v420, %v472
        %v481 = vadd.f32 %v421, %v473
        %v482 = vadd.f32 %v422, %v474
        %v483 = vadd.f32 %v423, %v475
        %v484 = vadd.f32 %v424, %v476
        %v485 = vlaneseq
        %v486 = vshrl.u32 %v485, 7
        %v487 = vsub.s32 6, %v486
        %v488 = vrot.slane %v276, %v487
        %v489 = vmul.f32 %v286, %v488
        %v490 = vmul.f32 %v288, %v488
        %v491 = vmul.f32 %v294, %v488
        %v492 = vmul.f32 %v296, %v488
        %v493 = vmul.f32 %v302, %v488
        %v494 = vmul.f32 %v304, %v488
        %v495 = vlaneseq
        %v496 = vshrl.u32 %v495, 7
        %v497 = vsub.s32 7, %v496
        %v498 = vrot.slane %v276, %v497
        %v499 = vmul.f32 %v318, %v498
        %v500 = vmul.f32 %v320, %v498
        %v501 = vmul.f32 %v326, %v498
        %v502 = vmul.f32 %v328, %v498
        %v503 = vmul.f32 %v334, %v498
        %v504 = vmul.f32 %v336, %v498
        %v505 = vadd.f32 %v489, %v499
        %v506 = vadd.f32 %v490, %v500
        %v507 = vadd.f32 %v491, %v501
        %v508 = vadd.f32 %v492, %v502
        %v509 = vadd.f32 %v493, %v503
        %v510 = vadd.f32 %v494, %v504
        %v511 = vlaneseq
        %v512 = vshrl.u32 %v511, 7
        %v513 = vsub.s32 0, %v512
        %v514 = vrot.slane %v277, %v513
        %v515 = vmul.f32 %v350, %v514
        %v516 = vmul.f32 %v352, %v514
        %v517 = vmul.f32 %v358, %v514
        %v518 = vmul.f32 %v360, %v514
        %v519 = vmul.f32 %v366, %v514
        %v520 = vmul.f32 %v368, %v514
        %v521 = vadd.f32 %v505, %v515
        %v522 = vadd.f32 %v506, %v516
        %v523 = vadd.f32 %v507, %v517
        %v524 = vadd.f32 %v508, %v518
        %v525 = vadd.f32 %v509, %v519
        %v526 = vadd.f32 %v510, %v520
        %v527 = vadd.f32 %v477, %v521
        %v528 = vadd.f32 %v478, %v522
        %v529 = vadd.f32 %v479, %v523
        %v530 = vadd.f32 %v480, %v524
        %v531 = vadd.f32 %v481, %v525
        %v532 = vadd.f32 %v482, %v526
        %vm533 = vcmask 785408
        %534 = vst.msk [vmem:[%s240] sm:$0xff] %vm533, %v527
        %535 = vst.msk [vmem:[%s240 + $0x8] sm:$0xff] %vm533, %v528
        %536 = vst.msk [vmem:[%s240 + $0x10] sm:$0xff] %vm533, %v529
        %537 = vst.msk [vmem:[%s240 + $0x18] sm:$0xff] %vm533, %v530
        %538 = vst.msk [vmem:[%s240 + $0x20] sm:$0xff] %vm533, %v531
        %539 = vst.msk [vmem:[%s240 + $0x28] sm:$0xff] %vm533, %v532
        %v540 = vld [vmem:[%s272] ss:$2 sm:$0xff]
        %s541 = scalar_lea.vmem %s272, 16
        %v542 = vld [vmem:[%s541] ss:$2 sm:$0xff]
        %s543 = scalar_lea.vmem %s272, 1
        %v544 = vld [vmem:[%s543] ss:$2 sm:$0xff]
        %s545 = scalar_lea.vmem %s272, 17
        %v546 = vld [vmem:[%s545] ss:$2 sm:$0xff]
        %s547 = scalar_lea.vmem %s272, 2
        %v548 = vld [vmem:[%s547] ss:$2 sm:$0xff]
        %s549 = scalar_lea.vmem %s272, 18
        %v550 = vld [vmem:[%s549] ss:$2 sm:$0xff]
        %v551 = vmul.f32 %v540, %v488
        %v552 = vmul.f32 %v542, %v488
        %v553 = vmul.f32 %v544, %v498
        %v554 = vmul.f32 %v546, %v498
        %v555 = vadd.f32 %v551, %v553
        %v556 = vadd.f32 %v552, %v554
        %v557 = vmul.f32 %v548, %v514
        %v558 = vmul.f32 %v550, %v514
        %v559 = vadd.f32 %v555, %v557
        %v560 = vadd.f32 %v556, %v558
        %v561 = vadd.f32 %v483, %v559
        %v562 = vadd.f32 %v484, %v560
        %s563 = scalar_lea.vmem %s240, 48 [#allocation2]
        %564 = vst.msk [vmem:[%s563] sm:$0xff] %vm533, %v561
        %565 = vst.msk [vmem:[%s563 + $0x8] sm:$0xff] %vm533, %v562
        %s566 = sand.u32 %s120, 1
        %s567 = scalar_lea.sflag [#allocation3], %s566
        %s568 = sand.u32 %s120, 1
        %s569 = smul.addr %s568, 64
        %s570 = scalar_lea.vmem [#allocation2], %s569
        // Predicated region
        $region33: #{depthwise_conv3x3_stride2.1} parent=31 // pred_check
          %p571 = pneg %p130
        $region34: #{depthwise_conv3x3_stride2.1} parent=31 // pred_check_branch
          %573 = sbr.rel (%p571) target = $region36
        $region35: #{depthwise_conv3x3_stride2.1} parent=31 // pred_region
          %s574 = smul.u32 4, %s22
          %s576 = ssub.s32 1024, 1024
          %577 = vsyncadd %s567, %s576
          %s578 = smul.addr %s574, 2
          %s579 = smul.addr %s21, 32
          %s580 = sadd.s32 %s578, %s579
          %s581 = smul.addr %s580, 128
          %s582 = scalar_lea.hbm %s3, %s581
          %s583 = sshll.u32 %s570, 4
          %s584 = int_to_ptr.vmem [resolvable:$true] %s583
          %589 = dma.vmem_to_hbm [thread:$0]  %s584, 1024, %s582, %s567, 128, 128, 8
        $region36: #{depthwise_conv3x3_stride2.1} parent=31 // pred_fallthru
          _
      $region32: #{depthwise_conv3x3_stride2.1} parent=5 // pred_fallthru
        _
      %p590 = scmp.le.s32.totalorder 2, %s12
      // Predicated region
      $region37: #{depthwise_conv3x3_stride2.1} parent=5 // pred_check
        %p591 = pneg %p590
      $region38: #{depthwise_conv3x3_stride2.1} parent=5 // pred_check_branch
        %593 = sbr.rel (%p591) target = $region40
      $region39: #{depthwise_conv3x3_stride2.1} parent=5 // pred_region
        %s594 = ssub.s32 %s12, 2
        // Predicated region
        $region41: #{depthwise_conv3x3_stride2.1} parent=39 // pred_check
          %p595 = pneg %p136
        $region42: #{depthwise_conv3x3_stride2.1} parent=39 // pred_check_branch
          %597 = sbr.rel (%p595) target = $region44
        $region43: #{depthwise_conv3x3_stride2.1} parent=39 // pred_region
          %s598 = sand.u32 %s121, 1
          %s599 = scalar_lea.sflag [#allocation3], %s598
          %s600 = sand.u32 %s121, 1
          %s601 = smul.addr %s600, 64
          %s602 = scalar_lea.vmem [#allocation2], %s601
          %603 = dma.done %s599, 1024
        $region44: #{depthwise_conv3x3_stride2.1} parent=39 // pred_fallthru
          _
      $region40: #{depthwise_conv3x3_stride2.1} parent=5 // pred_fallthru
        _
    $region6: #{depthwise_conv3x3_stride2.1} parent=1 // loop_footer
      %s16 = sadd.s32 1, %s12
    $region7: #{depthwise_conv3x3_stride2.1} parent=1 // loop_footer_branch
      %11 = sbr.rel target = $region3
    $region8: #{depthwise_conv3x3_stride2.1} parent=1 // loop_exit
      _
    %604 = vsyncpa [#allocation3], 1
    %s605 = scalar_lea.sflag [#allocation3], 1
    %606 = vsyncpa %s605, 1

</llo_original>
